<compile_context>
chip_gen: v5e
topology: v5e:2x2
jax: 0.10.0
libtpu: 0.0.40
codegen_flags: <defaults>
</compile_context>

<pallas_src>
import numpy as np
import jax
import jax.numpy as jnp
from jax.experimental import pallas as pl
from jax.experimental.pallas import tpu as pltpu

_NEG_BIG = -1e30
_CHUNK_GRAPHS = 32


def _attention_readout_kernel(x_ref,       # VMEM [CH, N_pad, D]  bf16/f32 node features
                              batch_ref,   # VMEM [CH, 1, N_pad]  int32 chunk-local ids (pad -> G)
                              counts_ref,  # VMEM [CH, 1, 1]      int32 valid-node count per chunk
                              w1_ref,      # VMEM [D, D]          bf16/f32
                              b1_ref,      # VMEM [1, D]          f32
                              w2_ref,      # VMEM [1, D]          f32 (Linear(D->1) as a row)
                              out_ref):    # VMEM [CH, G, D]      f32
    ch, n_pad, d = x_ref.shape
    g_pad = out_ref.shape[1]

    x = x_ref[...]                                                  # [CH, N, D]

    # Attention MLP: Linear(D->D) -> Tanh, fused over all CH chunks on the MXU
    # (rows = CH*N); bf16 inputs by default, f32 accumulation.
    x2 = x.reshape(ch * n_pad, d)
    h = jnp.tanh(jnp.dot(x2, w1_ref[...],
                         preferred_element_type=jnp.float32) + b1_ref[...])  # [CH*N, D] f32

    # Linear(D->1, no bias) as a VPU multiply + lane reduction (MXU stays free
    # for the two real matmuls).
    s = jnp.sum(h * w2_ref[...], axis=-1, keepdims=True)            # [CH*N, 1]
    s = s.reshape(ch, n_pad, 1)                                      # [CH, N, 1]

    # Per-chunk softmax over the node axis (padded rows masked out). Using -1e30
    # (not -inf) keeps fully-padded filler chunks NaN-free; their x rows are zero
    # and their batch ids never match, so they contribute nothing anyway.
    node_idx = jax.lax.broadcasted_iota(jnp.int32, (ch, n_pad, 1), 1)
    s = jnp.where(node_idx < counts_ref[...], s, _NEG_BIG)
    m = jnp.max(s, axis=1, keepdims=True)                            # [CH, 1, 1]
    e = jnp.exp(s - m)
    denom = jnp.sum(e, axis=1, keepdims=True)                        # [CH, 1, 1]
    w = e * (1.0 / denom)                                            # exact reciprocal (tiny)

    weighted = (w * x).astype(x_ref.dtype)                           # [CH, N, D]; pad rows -> 0

    # global_add_pool as a batched one-hot matmul on the MXU:
    # onehot[c, g, n] = (batch[c, n] == g); padded nodes carry id == g_pad -> zero column.
    gids = jax.lax.broadcasted_iota(jnp.int32, (ch, g_pad, n_pad), 1)
    onehot = (batch_ref[...] == gids).astype(x_ref.dtype)
    out_ref[...] = jnp.einsum('cgn,cnd->cgd', onehot, weighted,
                              preferred_element_type=jnp.float32)


# TODO(synk): for chunks with very large node counts, tile N with an inner
# "arbitrary" grid axis + online softmax so VMEM stays bounded on v7x's 64 MiB;
# unnecessary at these sizes.
def attention_readout(x, batch, w1, b1, w2, *, use_bf16_matmul=True,
                      chunk_size=_CHUNK_GRAPHS, chunks_per_step=None):
    """Forward pass of AttentionReadout via a single gridded pallas_call.

    x  : [N_total, D] float32 node features
    batch: [N_total] int graph id per node (0..batch_size-1)
    w1 : [D, D] first Linear weight stored [in, out];  b1: [D] or [1, D]
    w2 : [D, 1] or [D] second Linear weight (no bias)
    """
    x = jnp.asarray(x, jnp.float32)
    batch_np = np.asarray(batch).astype(np.int32)
    n_total, d = x.shape
    g_pad = chunk_size

    # ---- one-time host-side packing: chunks -> fixed [C, N_pad, D] layout ----
    batch_size = int(batch_np.max()) + 1
    chunk_defs = []
    for i in range(0, batch_size, chunk_size):
        idx = np.nonzero((batch_np >= i) & (batch_np < i + chunk_size))[0]
        if idx.size == 0:
            continue
        chunk_defs.append((idx, batch_np[idx] - i))
    num_chunks = len(chunk_defs)
    n_pad = max(len(idx) for idx, _ in chunk_defs)
    n_pad = max(16, ((n_pad + 15) // 16) * 16)     # bf16 sublane-pack friendly

    # Chunk fusion: amortize ~0.35 us/step overhead and fill the MXU / HBM pipes.
    # Keep the grid length >= 2 when possible (v7x has 2 TensorCores) and clamp
    # the fused block against the v7x VMEM budget (64 MiB physical).
    if chunks_per_step is None:
        chunks_per_step = max(1, min(8, num_chunks // 2))
    chunks_per_step = max(1, min(chunks_per_step, num_chunks))
    x_itemsize = 2 if use_bf16_matmul else 4

    def _step_bytes(c):
        x_blk = c * n_pad * d * x_itemsize
        out_blk = c * g_pad * d * 4
        interm = c * n_pad * (6 * d + 8 * g_pad)    # h, weighted, onehot/gids (rough)
        return 2 * x_blk + 2 * out_blk + interm + 2 * c * (n_pad + 1) * 4

    while chunks_per_step > 1 and _step_bytes(chunks_per_step) > 32 * 1024 * 1024:
        chunks_per_step -= 1
    ch = chunks_per_step
    num_steps = -(-num_chunks // ch)
    c_pad = num_steps * ch

    gather_idx = np.full((c_pad, n_pad), n_total, dtype=np.int32)      # n_total -> zero row
    batch_lane = np.full((c_pad, 1, n_pad), g_pad, dtype=np.int32)     # g_pad -> matches no graph
    counts = np.zeros((c_pad, 1, 1), dtype=np.int32)
    rows_per_chunk = []
    for c, (idx, local) in enumerate(chunk_defs):
        k = idx.size
        gather_idx[c, :k] = idx
        batch_lane[c, 0, :k] = local
        counts[c, 0, 0] = k
        rows_per_chunk.append(int(local.max()) + 1)   # rows emitted per chunk (as in PyTorch)

    mm_dtype = jnp.bfloat16 if use_bf16_matmul else jnp.float32
    x_ext = jnp.concatenate([x, jnp.zeros((1, d), jnp.float32)], axis=0)
    x_chunks = jnp.take(x_ext, jnp.asarray(gather_idx), axis=0).astype(mm_dtype)  # [C, N_pad, D]

    w1m = jnp.asarray(w1, jnp.float32).reshape(d, d).astype(mm_dtype)
    b1m = jnp.asarray(b1, jnp.float32).reshape(1, d)
    w2m = jnp.asarray(w2, jnp.float32).reshape(1, d)   # row form for the VPU reduce

    grid_spec = pltpu.PrefetchScalarGridSpec(
        num_scalar_prefetch=0,
        grid=(num_steps,),
        in_specs=[
            pl.BlockSpec((ch, n_pad, d), lambda c: (c, 0, 0)),   # x (pipelined, dominant DMA)
            pl.BlockSpec((ch, 1, n_pad), lambda c: (c, 0, 0)),   # chunk-local graph ids
            pl.BlockSpec((ch, 1, 1),     lambda c: (c, 0, 0)),   # valid-node counts
            pl.BlockSpec((d, d),         lambda c: (0, 0)),      # w1 (VMEM-resident)
            pl.BlockSpec((1, d),         lambda c: (0, 0)),      # b1 (resident)
            pl.BlockSpec((1, d),         lambda c: (0, 0)),      # w2 (resident)
        ],
        out_specs=pl.BlockSpec((ch, g_pad, d), lambda c: (c, 0, 0)),
    )

    flops = int(c_pad * (2 * n_pad * d * d          # x @ W1
                         + 2 * g_pad * n_pad * d    # one-hot pooling matmul
                         + 6 * n_pad * d))          # scoring / weighting VPU work
    transcendentals = int(c_pad * (n_pad * d + n_pad))
    bytes_accessed = int(x_chunks.size * x_itemsize
                         + batch_lane.size * 4 + counts.size * 4
                         + w1m.size * w1m.dtype.itemsize + b1m.size * 4 + w2m.size * 4
                         + c_pad * g_pad * d * 4)
    vmem_limit = int(min(48 * 2**20, max(32 * 2**20, 2 * _step_bytes(ch))))

    out_padded = pl.pallas_call(
        _attention_readout_kernel,
        out_shape=jax.ShapeDtypeStruct((c_pad, g_pad, d), jnp.float32),
        grid_spec=grid_spec,
        compiler_params=pltpu.CompilerParams(
            dimension_semantics=("parallel",),      # fused chunk-groups independent
            vmem_limit_bytes=vmem_limit,            # sized for v7x's 64 MiB physical
        ),
        cost_estimate=pl.CostEstimate(
            flops=flops, transcendentals=transcendentals, bytes_accessed=bytes_accessed),
    )(x_chunks, jnp.asarray(batch_lane), jnp.asarray(counts), w1m, b1m, w2m)

    # Un-pad with a single reshape + one gather (no per-chunk slice/concat ops).
    # Like the original, each chunk emits (max local graph id + 1) rows.
    row_idx = np.concatenate([c * g_pad + np.arange(r, dtype=np.int32)
                              for c, r in enumerate(rows_per_chunk)])
    flat = out_padded.reshape(c_pad * g_pad, d)
    return jnp.take(flat, jnp.asarray(row_idx), axis=0)


def attention_readout_reference(x, batch, w1, b1, w2, chunk_size=_CHUNK_GRAPHS):
    """Float64 numpy emulation of the PyTorch forward (ground truth)."""
    x64 = np.asarray(x, dtype=np.float64)
    w1_ = np.asarray(w1, np.float64).reshape(x64.shape[1], x64.shape[1])
    b1_ = np.asarray(b1, np.float64).reshape(1, -1)
    w2_ = np.asarray(w2, np.float64).reshape(-1, 1)
    batch_np = np.asarray(batch)
    outs = []
    for i in range(0, int(batch_np.max()) + 1, chunk_size):
        mask = (batch_np >= i) & (batch_np < i + chunk_size)
        if not mask.any():
            continue
        cx = x64[mask]
        cb = batch_np[mask] - i
        h = np.tanh(cx @ w1_ + b1_)
        s = h @ w2_
        e = np.exp(s - s.max())
        wts = e / e.sum()
        weighted = wts * cx
        g = int(cb.max()) + 1
        pooled = np.zeros((g, x64.shape[1]))
        np.add.at(pooled, cb, weighted)
        outs.append(pooled)
    return np.concatenate(outs, axis=0)


if __name__ == "__main__":
    hidden_dim = 32
    num_graphs = 40                             # 2 chunks of <=32 graphs -> grid=(2,)
    node_counts = np.array([4 + (i % 7) for i in range(num_graphs)], dtype=np.int32)
    batch = np.repeat(np.arange(num_graphs, dtype=np.int32), node_counts)
    n_total = int(batch.shape[0])               # 275 nodes

    key = jax.random.PRNGKey(0)
    kx, k1, k2, k3 = jax.random.split(key, 4)
    x = jax.random.normal(kx, (n_total, hidden_dim), dtype=jnp.float32)

    # PyTorch Linear-style uniform init, stored [in, out] so the kernel uses x @ W.
    bound = 1.0 / np.sqrt(hidden_dim)
    w1 = jax.random.uniform(k1, (hidden_dim, hidden_dim), jnp.float32, -bound, bound)
    b1 = jax.random.uniform(k2, (1, hidden_dim), jnp.float32, -bound, bound)
    w2 = jax.random.uniform(k3, (hidden_dim, 1), jnp.float32, -bound, bound)

    ref = attention_readout_reference(x, batch, w1, b1, w2)

    # Default path: bf16 MXU inputs on all generations (f32 accumulation).
    out = jax.block_until_ready(attention_readout(x, batch, w1, b1, w2))
    assert out.shape == (num_graphs, hidden_dim)
    np.testing.assert_allclose(np.asarray(out), ref, rtol=8e-2, atol=5e-3)

    # f32 MXU path (tighter parity check of the kernel structure itself).
    out_f32 = jax.block_until_ready(
        attention_readout(x, batch, w1, b1, w2, use_bf16_matmul=False))
    assert out_f32.shape == (num_graphs, hidden_dim)
    np.testing.assert_allclose(np.asarray(out_f32), ref, rtol=2e-2, atol=2e-3)

    print("KERNEL_OK")
</pallas_src>

<mosaic_0001>
module attributes {stable_mosaic.version = 11 : i64} {
  func.func @_attention_readout_kernel(%arg0: i32, %arg1: memref<1x224x32xbf16, #tpu.memory_space<vmem>>, %arg2: memref<1x1x224xi32, #tpu.memory_space<vmem>>, %arg3: memref<1x1x1xi32, #tpu.memory_space<vmem>>, %arg4: memref<32x32xbf16, #tpu.memory_space<vmem>>, %arg5: memref<1x32xf32, #tpu.memory_space<vmem>>, %arg6: memref<1x32xf32, #tpu.memory_space<vmem>>, %arg7: memref<1x32x32xf32, #tpu.memory_space<vmem>>) attributes {dimension_semantics = [#tpu.dimension_semantics<parallel>], iteration_bounds = array<i64: 2>, scalar_prefetch = 0 : i64, scratch_operands = 0 : i64, tpu.core_type = #tpu.core_type<tc>, window_params = [{transform_indices = @transform_0, window_bounds = array<i64: 1, 224, 32>}, {transform_indices = @transform_1, window_bounds = array<i64: 1, 1, 224>}, {transform_indices = @transform_2, window_bounds = array<i64: 1, 1, 1>}, {pipeline_mode = #tpu.pipeline_mode<synchronous>, transform_indices = @transform_3, window_bounds = array<i64: 32, 32>}, {pipeline_mode = #tpu.pipeline_mode<synchronous>, transform_indices = @transform_4, window_bounds = array<i64: 1, 32>}, {pipeline_mode = #tpu.pipeline_mode<synchronous>, transform_indices = @transform_5, window_bounds = array<i64: 1, 32>}, {transform_indices = @transform_6, window_bounds = array<i64: 1, 32, 32>}]} {
    %c0 = arith.constant 0 : index
    %c0_0 = arith.constant 0 : index
    %c0_1 = arith.constant 0 : index
    %0 = vector.load %arg1[%c0, %c0_0, %c0_1] : memref<1x224x32xbf16, #tpu.memory_space<vmem>>, vector<1x224x32xbf16>
    %1 = vector.shape_cast %0 : vector<1x224x32xbf16> to vector<224x32xbf16>
    %c0_2 = arith.constant 0 : index
    %c0_3 = arith.constant 0 : index
    %2 = vector.load %arg4[%c0_2, %c0_3] : memref<32x32xbf16, #tpu.memory_space<vmem>>, vector<32x32xbf16>
    %cst = arith.constant dense<0.000000e+00> : vector<224x32xf32>
    %3 = tpu.matmul %1, %2, %cst {dimension_numbers = #tpu.dot_dimension_numbers<[1], [0], [0], [1], [0, 0, 1, 1], [], []>} : vector<224x32xbf16>, vector<32x32xbf16>, vector<224x32xf32> -> vector<224x32xf32>
    %c0_4 = arith.constant 0 : index
    %c0_5 = arith.constant 0 : index
    %4 = vector.load %arg5[%c0_4, %c0_5] : memref<1x32xf32, #tpu.memory_space<vmem>>, vector<1x32xf32>
    %5 = vector.broadcast %4 : vector<1x32xf32> to vector<224x32xf32>
    %6 = arith.addf %3, %5 : vector<224x32xf32>
    %7 = math.tanh %6 : vector<224x32xf32>
    %c0_6 = arith.constant 0 : index
    %c0_7 = arith.constant 0 : index
    %8 = vector.load %arg6[%c0_6, %c0_7] : memref<1x32xf32, #tpu.memory_space<vmem>>, vector<1x32xf32>
    %9 = vector.broadcast %8 : vector<1x32xf32> to vector<224x32xf32>
    %10 = arith.mulf %7, %9 : vector<224x32xf32>
    %cst_8 = arith.constant dense<0.000000e+00> : vector<224xf32>
    %11 = vector.multi_reduction <add>, %10, %cst_8 [1] : vector<224x32xf32> to vector<224xf32>
    %12 = vector.shape_cast %11 : vector<224xf32> to vector<224x1xf32>
    %13 = vector.shape_cast %12 : vector<224x1xf32> to vector<1x224x1xf32>
    %14 = tpu.iota {dimensions = array<i32: 1>} : vector<1x224x1xi32>
    %c0_9 = arith.constant 0 : index
    %c0_10 = arith.constant 0 : index
    %c0_11 = arith.constant 0 : index
    %15 = vector.load %arg3[%c0_9, %c0_10, %c0_11] : memref<1x1x1xi32, #tpu.memory_space<vmem>>, vector<1x1x1xi32>
    %16 = vector.broadcast %15 : vector<1x1x1xi32> to vector<1x224x1xi32>
    %17 = arith.cmpi slt, %14, %16 : vector<1x224x1xi32>
    %cst_12 = arith.constant -1.000000e+30 : f32
    %18 = vector.broadcast %cst_12 : f32 to vector<1x224x1xf32>
    %19 = arith.select %17, %13, %18 : vector<1x224x1xi1>, vector<1x224x1xf32>
    %cst_13 = arith.constant dense<0xFF800000> : vector<1x1xf32>
    %20 = vector.multi_reduction <maximumf>, %19, %cst_13 [1] : vector<1x224x1xf32> to vector<1x1xf32>
    %21 = vector.shape_cast %20 : vector<1x1xf32> to vector<1x1x1xf32>
    %22 = vector.broadcast %21 : vector<1x1x1xf32> to vector<1x224x1xf32>
    %23 = arith.subf %19, %22 : vector<1x224x1xf32>
    %24 = math.exp %23 : vector<1x224x1xf32>
    %cst_14 = arith.constant dense<0.000000e+00> : vector<1x1xf32>
    %25 = vector.multi_reduction <add>, %24, %cst_14 [1] : vector<1x224x1xf32> to vector<1x1xf32>
    %26 = vector.shape_cast %25 : vector<1x1xf32> to vector<1x1x1xf32>
    %cst_15 = arith.constant 1.000000e+00 : f32
    %27 = vector.broadcast %cst_15 : f32 to vector<1x1x1xf32>
    %28 = arith.divf %27, %26 : vector<1x1x1xf32>
    %29 = vector.broadcast %28 : vector<1x1x1xf32> to vector<1x224x1xf32>
    %30 = arith.mulf %24, %29 : vector<1x224x1xf32>
    %31 = arith.extf %0 : vector<1x224x32xbf16> to vector<1x224x32xf32>
    %32 = vector.broadcast %30 : vector<1x224x1xf32> to vector<1x224x32xf32>
    %33 = arith.mulf %32, %31 : vector<1x224x32xf32>
    %34 = arith.truncf %33 : vector<1x224x32xf32> to vector<1x224x32xbf16>
    %35 = tpu.iota {dimensions = array<i32: 1>} : vector<1x32x224xi32>
    %c0_16 = arith.constant 0 : index
    %c0_17 = arith.constant 0 : index
    %c0_18 = arith.constant 0 : index
    %36 = vector.load %arg2[%c0_16, %c0_17, %c0_18] : memref<1x1x224xi32, #tpu.memory_space<vmem>>, vector<1x1x224xi32>
    %37 = vector.broadcast %36 : vector<1x1x224xi32> to vector<1x32x224xi32>
    %38 = arith.cmpi eq, %37, %35 : vector<1x32x224xi32>
    %39 = arith.extui %38 : vector<1x32x224xi1> to vector<1x32x224xi32>
    %40 = arith.sitofp %39 : vector<1x32x224xi32> to vector<1x32x224xf32>
    %41 = arith.truncf %40 : vector<1x32x224xf32> to vector<1x32x224xbf16>
    "tpu.trace_start"() <{level = 10 : i32, message = "cgn,cnd->cgd"}> : () -> ()
    %cst_19 = arith.constant dense<0.000000e+00> : vector<1x32x32xf32>
    %42 = tpu.matmul %41, %34, %cst_19 {dimension_numbers = #tpu.dot_dimension_numbers<[2], [1], [1], [2], [0, 0, 0, 1, 1, 2], [0], [0]>} : vector<1x32x224xbf16>, vector<1x224x32xbf16>, vector<1x32x32xf32> -> vector<1x32x32xf32>
    "tpu.trace_stop"() : () -> ()
    %c0_20 = arith.constant 0 : index
    %c0_21 = arith.constant 0 : index
    %c0_22 = arith.constant 0 : index
    %43 = vector.load %arg7[%c0_20, %c0_21, %c0_22] : memref<1x32x32xf32, #tpu.memory_space<vmem>>, vector<1x32x32xf32>
    tpu.vector_store %arg7[%c0_20, %c0_21, %c0_22], %42 {strides = array<i32>} : memref<1x32x32xf32, #tpu.memory_space<vmem>>, vector<1x32x32xf32>,
    return
  }
  func.func @transform_0(%arg0: i32) -> (i32, i32, i32) {
    %c0_i32 = arith.constant 0 : i32
    %c0_i32_0 = arith.constant 0 : i32
    %c0_i32_1 = arith.constant 0 : i32
    return %arg0, %c0_i32, %c0_i32_0 : i32, i32, i32
  }
  func.func @transform_1(%arg0: i32) -> (i32, i32, i32) {
    %c0_i32 = arith.constant 0 : i32
    %c0_i32_0 = arith.constant 0 : i32
    %c0_i32_1 = arith.constant 0 : i32
    return %arg0, %c0_i32, %c0_i32_0 : i32, i32, i32
  }
  func.func @transform_2(%arg0: i32) -> (i32, i32, i32) {
    %c0_i32 = arith.constant 0 : i32
    %c0_i32_0 = arith.constant 0 : i32
    %c0_i32_1 = arith.constant 0 : i32
    return %arg0, %c0_i32, %c0_i32_0 : i32, i32, i32
  }
  func.func @transform_3(%arg0: i32) -> (i32, i32) {
    %c0_i32 = arith.constant 0 : i32
    %c0_i32_0 = arith.constant 0 : i32
    %c0_i32_1 = arith.constant 0 : i32
    return %c0_i32, %c0_i32_0 : i32, i32
  }
  func.func @transform_4(%arg0: i32) -> (i32, i32) {
    %c0_i32 = arith.constant 0 : i32
    %c0_i32_0 = arith.constant 0 : i32
    %c0_i32_1 = arith.constant 0 : i32
    return %c0_i32, %c0_i32_0 : i32, i32
  }
  func.func @transform_5(%arg0: i32) -> (i32, i32) {
    %c0_i32 = arith.constant 0 : i32
    %c0_i32_0 = arith.constant 0 : i32
    %c0_i32_1 = arith.constant 0 : i32
    return %c0_i32, %c0_i32_0 : i32, i32
  }
  func.func @transform_6(%arg0: i32) -> (i32, i32, i32) {
    %c0_i32 = arith.constant 0 : i32
    %c0_i32_0 = arith.constant 0 : i32
    %c0_i32_1 = arith.constant 0 : i32
    return %arg0, %c0_i32, %c0_i32_0 : i32, i32, i32
  }
}

</mosaic_0001>

<llo_original>
// kernel: tpu_custom_call.1
$region0: #{tpu_custom_call.1}
  #allocation0 [shape = 'u32[]', space=smem, size = 0x4, offset = 0x4, fixed_abs, tag = 'smem constant byte address 0x4 - core index']
  #allocation1 [shape = 'u32[72,128]{1,0:T(1,128)}', space=vmem, size = 0x9000, scoped, tag = 'internal scratch']
  %s0 = inlined_call_operand.vmem [shape: bf16[2,224,32], index: 0, kind: input, shape index: {}]
  %s1 = inlined_call_operand.vmem [shape: s32[2,1,224], index: 1, kind: input, shape index: {}]
  %s2 = inlined_call_operand.vmem [shape: s32[2,1,1], index: 2, kind: input, shape index: {}]
  %s3 = inlined_call_operand.vmem [shape: bf16[32,32], index: 3, kind: input, shape index: {}]
  %s4 = inlined_call_operand.vmem [shape: f32[1,32], index: 4, kind: input, shape index: {}]
  %s5 = inlined_call_operand.vmem [shape: f32[1,32], index: 5, kind: input, shape index: {}]
  %s6 = inlined_call_operand.hbm [shape: f32[2,32,32], index: 6, kind: output, shape index: {}]
  %s7 = sld [smem:[#allocation0]]
  $region57: #{tpu_custom_call.1} parent=0
    _
  %s9 = ssub.s32 1, %s7
  %s10 = scalar_select 0, %s9, %s7
  $region1: #{tpu_custom_call.1} parent=0
    #allocation2 [shape = 'u8[32768]{0}', space=vmem, size = 0x8000, scoped, tag = 'output window, operand 0']
    #allocation3 [shape = 's32[2]{0}', space=sflag, size = 0x8, scoped, tag = 'scoped memory for tpu_custom_call.1']
    %11 = vsyncpa [#allocation3], 0
    %s12 = scalar_lea.sflag [#allocation3], 1
    %13 = vsyncpa %s12, 0
    loop: start=0, step=1, limit=4
    $region2: #{tpu_custom_call.1} parent=1 // loop_pre_header
      _
    $region3: #{tpu_custom_call.1} parent=1 // loop_header
      %s15 = sphi 0, %s19
      %p16 = scmp.ge.s32.totalorder %s15, 4
      %s25 = sphi 0, %s27
      %s28 = sphi 0, %s25
      %s29 = sphi 0, %s28
      %s45 = sphi 0, %s29
      %s51 = sphi 0, %s53
      %s54 = sphi 0, %s51
      %s55 = sphi 0, %s54
      %s71 = sphi 0, %s55
      %s77 = sphi 0, %s79
      %s80 = sphi 0, %s77
      %s81 = sphi 0, %s80
      %s97 = sphi 0, %s81
      %s101 = sphi 0, %s101
      %s103 = sphi 0, %s101
      %s104 = sphi 0, %s103
      %s118 = sphi 0, %s104
      %s122 = sphi 0, %s122
      %s124 = sphi 0, %s122
      %s125 = sphi 0, %s124
      %s139 = sphi 0, %s125
      %s143 = sphi 0, %s143
      %s145 = sphi 0, %s143
      %s146 = sphi 0, %s145
      %s160 = sphi 0, %s146
      %s166 = sphi 0, %s168
      %s169 = sphi 0, %s166
      %s170 = sphi 0, %s169
      %s186 = sphi 0, %s170
    $region4: #{tpu_custom_call.1} parent=1 // loop_header_branch
      %18 = sbr.rel (%p16) target = $region8
    $region5: #{tpu_custom_call.1} parent=1 // loop_body
      %s20 = ssub.s32 %s15, 1
      %s21 = ssub.s32 %s15, 2
      %s22 = sadd.s32 %s15, 1
      %s23 = ssub.s32 %s15, %s22
      %p24 = scmp.eq.s32.totalorder %s23, 0
      %s26 = sadd.s32 %s25, 1
      %s27 = scalar_select %p24, %s25, %s26
      %p30 = pneg %p24
      %p31 = scmp.eq.s32.totalorder %s15, 1
      %p32 = por %p30, %p31
      %p33 = scmp.ne.s32.totalorder %s25, %s28
      %p34 = scmp.eq.s32.totalorder %s15, 0
      %p35 = por %p33, %p34
      %p36 = scmp.ne.s32.totalorder %s25, %s28
      %p37 = scmp.eq.s32.totalorder %s20, 1
      %p38 = por %p36, %p37
      %p39 = scmp.ne.s32.totalorder %s28, %s29
      %p40 = scmp.eq.s32.totalorder %s20, 0
      %p41 = por %p39, %p40
      %p42 = scmp.ne.s32.totalorder %s28, %s29
      %p43 = scmp.eq.s32.totalorder %s21, 1
      %p44 = por %p42, %p43
      %p46 = scmp.ne.s32.totalorder %s29, %s45
      %p47 = scmp.eq.s32.totalorder %s21, 0
      %p48 = por %p46, %p47
      %s49 = ssub.s32 %s15, %s22
      %p50 = scmp.eq.s32.totalorder %s49, 0
      %s52 = sadd.s32 %s51, 1
      %s53 = scalar_select %p50, %s51, %s52
      %p56 = pneg %p50
      %p57 = scmp.eq.s32.totalorder %s15, 1
      %p58 = por %p56, %p57
      %p59 = scmp.ne.s32.totalorder %s51, %s54
      %p60 = scmp.eq.s32.totalorder %s15, 0
      %p61 = por %p59, %p60
      %p62 = scmp.ne.s32.totalorder %s51, %s54
      %p63 = scmp.eq.s32.totalorder %s20, 1
      %p64 = por %p62, %p63
      %p65 = scmp.ne.s32.totalorder %s54, %s55
      %p66 = scmp.eq.s32.totalorder %s20, 0
      %p67 = por %p65, %p66
      %p68 = scmp.ne.s32.totalorder %s54, %s55
      %p69 = scmp.eq.s32.totalorder %s21, 1
      %p70 = por %p68, %p69
      %p72 = scmp.ne.s32.totalorder %s55, %s71
      %p73 = scmp.eq.s32.totalorder %s21, 0
      %p74 = por %p72, %p73
      %s75 = ssub.s32 %s15, %s22
      %p76 = scmp.eq.s32.totalorder %s75, 0
      %s78 = sadd.s32 %s77, 1
      %s79 = scalar_select %p76, %s77, %s78
      %p82 = pneg %p76
      %p83 = scmp.eq.s32.totalorder %s15, 1
      %p84 = por %p82, %p83
      %p85 = scmp.ne.s32.totalorder %s77, %s80
      %p86 = scmp.eq.s32.totalorder %s15, 0
      %p87 = por %p85, %p86
      %p88 = scmp.ne.s32.totalorder %s77, %s80
      %p89 = scmp.eq.s32.totalorder %s20, 1
      %p90 = por %p88, %p89
      %p91 = scmp.ne.s32.totalorder %s80, %s81
      %p92 = scmp.eq.s32.totalorder %s20, 0
      %p93 = por %p91, %p92
      %p94 = scmp.ne.s32.totalorder %s80, %s81
      %p95 = scmp.eq.s32.totalorder %s21, 1
      %p96 = por %p94, %p95
      %p98 = scmp.ne.s32.totalorder %s81, %s97
      %p99 = scmp.eq.s32.totalorder %s21, 0
      %p100 = por %p98, %p99
      %s102 = sadd.s32 %s101, 1
      %p105 = scmp.eq.s32.totalorder %s15, 1
      %p106 = scmp.ne.s32.totalorder %s101, %s103
      %p107 = scmp.eq.s32.totalorder %s15, 0
      %p108 = por %p106, %p107
      %p109 = scmp.ne.s32.totalorder %s101, %s103
      %p110 = scmp.eq.s32.totalorder %s20, 1
      %p111 = por %p109, %p110
      %p112 = scmp.ne.s32.totalorder %s103, %s104
      %p113 = scmp.eq.s32.totalorder %s20, 0
      %p114 = por %p112, %p113
      %p115 = scmp.ne.s32.totalorder %s103, %s104
      %p116 = scmp.eq.s32.totalorder %s21, 1
      %p117 = por %p115, %p116
      %p119 = scmp.ne.s32.totalorder %s104, %s118
      %p120 = scmp.eq.s32.totalorder %s21, 0
      %p121 = por %p119, %p120
      %s123 = sadd.s32 %s122, 1
      %p126 = scmp.eq.s32.totalorder %s15, 1
      %p127 = scmp.ne.s32.totalorder %s122, %s124
      %p128 = scmp.eq.s32.totalorder %s15, 0
      %p129 = por %p127, %p128
      %p130 = scmp.ne.s32.totalorder %s122, %s124
      %p131 = scmp.eq.s32.totalorder %s20, 1
      %p132 = por %p130, %p131
      %p133 = scmp.ne.s32.totalorder %s124, %s125
      %p134 = scmp.eq.s32.totalorder %s20, 0
      %p135 = por %p133, %p134
      %p136 = scmp.ne.s32.totalorder %s124, %s125
      %p137 = scmp.eq.s32.totalorder %s21, 1
      %p138 = por %p136, %p137
      %p140 = scmp.ne.s32.totalorder %s125, %s139
      %p141 = scmp.eq.s32.totalorder %s21, 0
      %p142 = por %p140, %p141
      %s144 = sadd.s32 %s143, 1
      %p147 = scmp.eq.s32.totalorder %s15, 1
      %p148 = scmp.ne.s32.totalorder %s143, %s145
      %p149 = scmp.eq.s32.totalorder %s15, 0
      %p150 = por %p148, %p149
      %p151 = scmp.ne.s32.totalorder %s143, %s145
      %p152 = scmp.eq.s32.totalorder %s20, 1
      %p153 = por %p151, %p152
      %p154 = scmp.ne.s32.totalorder %s145, %s146
      %p155 = scmp.eq.s32.totalorder %s20, 0
      %p156 = por %p154, %p155
      %p157 = scmp.ne.s32.totalorder %s145, %s146
      %p158 = scmp.eq.s32.totalorder %s21, 1
      %p159 = por %p157, %p158
      %p161 = scmp.ne.s32.totalorder %s146, %s160
      %p162 = scmp.eq.s32.totalorder %s21, 0
      %p163 = por %p161, %p162
      %s164 = ssub.s32 %s15, %s22
      %p165 = scmp.eq.s32.totalorder %s164, 0
      %s167 = sadd.s32 %s166, 1
      %s168 = scalar_select %p165, %s166, %s167
      %p171 = pneg %p165
      %p172 = scmp.eq.s32.totalorder %s15, 1
      %p173 = por %p171, %p172
      %p174 = scmp.ne.s32.totalorder %s166, %s169
      %p175 = scmp.eq.s32.totalorder %s15, 0
      %p176 = por %p174, %p175
      %p177 = scmp.ne.s32.totalorder %s166, %s169
      %p178 = scmp.eq.s32.totalorder %s20, 1
      %p179 = por %p177, %p178
      %p180 = scmp.ne.s32.totalorder %s169, %s170
      %p181 = scmp.eq.s32.totalorder %s20, 0
      %p182 = por %p180, %p181
      %p183 = scmp.ne.s32.totalorder %s169, %s170
      %p184 = scmp.eq.s32.totalorder %s21, 1
      %p185 = por %p183, %p184
      %p187 = scmp.ne.s32.totalorder %s170, %s186
      %p188 = scmp.eq.s32.totalorder %s21, 0
      %p189 = por %p187, %p188
      %p190 = scmp.le.s32.totalorder 1, %s15
      %p191 = scmp.lt.s32.totalorder %s15, 3
      %p192 = pnand %p190, %p191
      %p193 = pneg %p192
      // Predicated region
      $region9: #{tpu_custom_call.1} parent=5 // pred_check
        _
      $region10: #{tpu_custom_call.1} parent=5 // pred_check_branch
        %195 = sbr.rel (%p192) target = $region12
      $region11: #{tpu_custom_call.1} parent=5 // pred_region
        %s196 = ssub.s32 %s15, 1
        // Predicated region
        $region13: #{tpu_custom_call.1} parent=11 // pred_check
          %p197 = pneg %p114
        $region14: #{tpu_custom_call.1} parent=11 // pred_check_branch
          %199 = sbr.rel (%p197) target = $region16
        $region15: #{tpu_custom_call.1} parent=11 // pred_region
          _
        $region16: #{tpu_custom_call.1} parent=11 // pred_fallthru
          _
        // Predicated region
        $region17: #{tpu_custom_call.1} parent=11 // pred_check
          %p200 = pneg %p135
        $region18: #{tpu_custom_call.1} parent=11 // pred_check_branch
          %202 = sbr.rel (%p200) target = $region20
        $region19: #{tpu_custom_call.1} parent=11 // pred_region
          _
        $region20: #{tpu_custom_call.1} parent=11 // pred_fallthru
          _
        // Predicated region
        $region21: #{tpu_custom_call.1} parent=11 // pred_check
          %p203 = pneg %p156
        $region22: #{tpu_custom_call.1} parent=11 // pred_check_branch
          %205 = sbr.rel (%p203) target = $region24
        $region23: #{tpu_custom_call.1} parent=11 // pred_region
          _
        $region24: #{tpu_custom_call.1} parent=11 // pred_fallthru
          _
      $region12: #{tpu_custom_call.1} parent=5 // pred_fallthru
        _
      %p206 = scmp.lt.s32.totalorder %s15, 2
      // Predicated region
      $region25: #{tpu_custom_call.1} parent=5 // pred_check
        %p207 = pneg %p206
      $region26: #{tpu_custom_call.1} parent=5 // pred_check_branch
        %209 = sbr.rel (%p207) target = $region28
      $region27: #{tpu_custom_call.1} parent=5 // pred_region
        // Predicated region
        $region29: #{tpu_custom_call.1} parent=27 // pred_check
          %p210 = pneg %p35
        $region30: #{tpu_custom_call.1} parent=27 // pred_check_branch
          %212 = sbr.rel (%p210) target = $region32
        $region31: #{tpu_custom_call.1} parent=27 // pred_region
          %p213 = scmp.lt.s32.totalorder %s15, 1
          %s214 = scalar_select %p213, %s15, 1
          %s215 = smul.addr %s214, 28
          %s216 = smul.addr %s215, 4
          %s217 = scalar_lea.vmem %s0, %s216
        $region32: #{tpu_custom_call.1} parent=27 // pred_fallthru
          _
        // Predicated region
        $region33: #{tpu_custom_call.1} parent=27 // pred_check
          %p218 = pneg %p61
        $region34: #{tpu_custom_call.1} parent=27 // pred_check_branch
          %220 = sbr.rel (%p218) target = $region36
        $region35: #{tpu_custom_call.1} parent=27 // pred_region
          %p221 = scmp.lt.s32.totalorder %s15, 1
          %s222 = scalar_select %p221, %s15, 1
          %s223 = smul.addr %s222, 2
          %s224 = scalar_lea.vmem %s1, %s223
        $region36: #{tpu_custom_call.1} parent=27 // pred_fallthru
          _
        // Predicated region
        $region37: #{tpu_custom_call.1} parent=27 // pred_check
          %p225 = pneg %p87
        $region38: #{tpu_custom_call.1} parent=27 // pred_check_branch
          %227 = sbr.rel (%p225) target = $region40
        $region39: #{tpu_custom_call.1} parent=27 // pred_region
          %p228 = scmp.lt.s32.totalorder %s15, 1
          %s229 = scalar_select %p228, %s15, 1
          %s230 = scalar_lea.vmem %s2, %s229
        $region40: #{tpu_custom_call.1} parent=27 // pred_fallthru
          _
      $region28: #{tpu_custom_call.1} parent=5 // pred_fallthru
        _
      %p231 = scmp.le.s32.totalorder 1, %s15
      %p232 = scmp.lt.s32.totalorder %s15, 3
      %p233 = pnand %p231, %p232
      %p234 = pneg %p233
      // Predicated region
      $region41: #{tpu_custom_call.1} parent=5 // pred_check
        _
      $region42: #{tpu_custom_call.1} parent=5 // pred_check_branch
        %236 = sbr.rel (%p233) target = $region44
      $region43: #{tpu_custom_call.1} parent=5 // pred_region
        %s237 = ssub.s32 %s15, 1
        %p238 = scmp.lt.s32.totalorder %s20, 1
        %s239 = scalar_select %p238, %s20, 1
        %s240 = smul.addr %s239, 28
        %s241 = smul.addr %s240, 4
        %s242 = scalar_lea.vmem %s0, %s241
        %p243 = pneg %p41
        %p244 = pneg %p38
        %p245 = scmp.lt.s32.totalorder %s20, 1
        %s246 = scalar_select %p245, %s20, 1
        %s247 = smul.addr %s246, 2
        %s248 = scalar_lea.vmem %s1, %s247
        %p249 = pneg %p67
        %p250 = pneg %p64
        %p251 = scmp.lt.s32.totalorder %s20, 1
        %s252 = scalar_select %p251, %s20, 1
        %s253 = scalar_lea.vmem %s2, %s252
        %p254 = pneg %p93
        %p255 = pneg %p90
        %p256 = pneg %p114
        %p257 = pneg %p111
        %p258 = pneg %p135
        %p259 = pneg %p132
        %p260 = pneg %p156
        %p261 = pneg %p153
        %p262 = pneg %p182
        %p263 = pneg %p179
        %s264 = sand.u32 %s169, 1
        %s265 = scalar_lea.sflag [#allocation3], %s264
        %s266 = sand.u32 %s169, 1
        %s267 = smul.addr %s266, 32
        %s268 = scalar_lea.vmem [#allocation2], %s267
        %p269 = scmp.lt.s32.totalorder %s20, 1
        %s270 = scalar_select %p269, %s20, 1
        %s271 = smul.addr %s270, 28
        %s272 = smul.addr %s271, 4
        %s273 = scalar_lea.vmem %s0, %s272
        %p274 = scmp.lt.s32.totalorder %s20, 1
        %s275 = scalar_select %p274, %s20, 1
        %s276 = smul.addr %s275, 2
        %s277 = scalar_lea.vmem %s1, %s276
        %p278 = scmp.lt.s32.totalorder %s20, 1
        %s279 = scalar_select %p278, %s20, 1
        %s280 = scalar_lea.vmem %s2, %s279
        %v282 = vld [vmem:[%s273] sm:$0xf]
        %v283 = vld [vmem:[%s273 + $0x4] sm:$0xf]
        %v284 = vld [vmem:[%s273 + $0x8] sm:$0xf]
        %v285 = vld [vmem:[%s273 + $0xc] sm:$0xf]
        %v286 = vld [vmem:[%s273 + $0x10] sm:$0xf]
        %v287 = vld [vmem:[%s273 + $0x14] sm:$0xf]
        %v288 = vld [vmem:[%s273 + $0x18] sm:$0xf]
        %v289 = vld [vmem:[%s273 + $0x1c] sm:$0xf]
        %v290 = vld [vmem:[%s273 + $0x20] sm:$0xf]
        %v291 = vld [vmem:[%s273 + $0x24] sm:$0xf]
        %v292 = vld [vmem:[%s273 + $0x28] sm:$0xf]
        %v293 = vld [vmem:[%s273 + $0x2c] sm:$0xf]
        %v294 = vld [vmem:[%s273 + $0x30] sm:$0xf]
        %v295 = vld [vmem:[%s273 + $0x34] sm:$0xf]
        %v296 = vld [vmem:[%s273 + $0x38] sm:$0xf]
        %v297 = vld [vmem:[%s273 + $0x3c] sm:$0xf]
        %v298 = vld [vmem:[%s273 + $0x40] sm:$0xf]
        %v299 = vld [vmem:[%s273 + $0x44] sm:$0xf]
        %v300 = vld [vmem:[%s273 + $0x48] sm:$0xf]
        %v301 = vld [vmem:[%s273 + $0x4c] sm:$0xf]
        %v302 = vld [vmem:[%s273 + $0x50] sm:$0xf]
        %v303 = vld [vmem:[%s273 + $0x54] sm:$0xf]
        %v304 = vld [vmem:[%s273 + $0x58] sm:$0xf]
        %v305 = vld [vmem:[%s273 + $0x5c] sm:$0xf]
        %v306 = vld [vmem:[%s273 + $0x60] sm:$0xf]
        %v307 = vld [vmem:[%s273 + $0x64] sm:$0xf]
        %v308 = vld [vmem:[%s273 + $0x68] sm:$0xf]
        %v309 = vld [vmem:[%s273 + $0x6c] sm:$0xf]
        %v310 = vld [vmem:[%s3] sm:$0xf]
        %v311 = vld [vmem:[%s3 + $0x4] sm:$0xf]
        %v312 = vld [vmem:[%s3 + $0x8] sm:$0xf]
        %v313 = vld [vmem:[%s3 + $0xc] sm:$0xf]
        %v314 = vld [vmem:[%s4] sm:$0x1]
        %v316 = vperm.slane %v314, 0
        %v346 = vunpack.c.l.b16 %v282
        %v347 = vunpack.c.l.b16 %v283
        %v348 = vunpack.c.l.b16 %v284
        %v349 = vunpack.c.l.b16 %v285
        %v350 = vunpack.c.l.b16 %v286
        %v351 = vunpack.c.l.b16 %v287
        %v352 = vunpack.c.l.b16 %v288
        %v353 = vunpack.c.l.b16 %v289
        %v354 = vunpack.c.l.b16 %v290
        %v355 = vunpack.c.l.b16 %v291
        %v356 = vunpack.c.l.b16 %v292
        %v357 = vunpack.c.l.b16 %v293
        %v358 = vunpack.c.l.b16 %v294
        %v359 = vunpack.c.l.b16 %v295
        %v360 = vunpack.c.l.b16 %v296
        %v361 = vunpack.c.l.b16 %v297
        %v362 = vunpack.c.l.b16 %v298
        %v363 = vunpack.c.l.b16 %v299
        %v364 = vunpack.c.l.b16 %v300
        %v365 = vunpack.c.l.b16 %v301
        %v366 = vunpack.c.l.b16 %v302
        %v367 = vunpack.c.l.b16 %v303
        %v368 = vunpack.c.l.b16 %v304
        %v369 = vunpack.c.l.b16 %v305
        %v370 = vunpack.c.l.b16 %v306
        %v371 = vunpack.c.l.b16 %v307
        %v372 = vunpack.c.l.b16 %v308
        %v373 = vunpack.c.l.b16 %v309
        %v374 = vpack.c.b16 %v347, %v346
        %v375 = vpack.c.b16 %v349, %v348
        %v376 = vpack.c.b16 %v351, %v350
        %v377 = vpack.c.b16 %v353, %v352
        %v378 = vpack.c.b16 %v355, %v354
        %v379 = vpack.c.b16 %v357, %v356
        %v380 = vpack.c.b16 %v359, %v358
        %v381 = vpack.c.b16 %v361, %v360
        %v382 = vpack.c.b16 %v363, %v362
        %v383 = vpack.c.b16 %v365, %v364
        %v384 = vpack.c.b16 %v367, %v366
        %v385 = vpack.c.b16 %v369, %v368
        %v386 = vpack.c.b16 %v371, %v370
        %v387 = vpack.c.b16 %v373, %v372
        %v392 = vunpack.c.l.b16 %v310
        %v393 = vunpack.c.l.b16 %v311
        %v394 = vunpack.c.l.b16 %v312
        %v395 = vunpack.c.l.b16 %v313
        %v396 = vpack.c.b16 %v393, %v392
        %v397 = vpack.c.b16 %v395, %v394
        %vm400 = vcmask 261120
        %v402 = vsel %vm400, %v374, 0
        %v405 = vsel %vm400, %v375, 0
        %v408 = vsel %vm400, %v376, 0
        %v411 = vsel %vm400, %v377, 0
        %v414 = vsel %vm400, %v378, 0
        %v417 = vsel %vm400, %v379, 0
        %v420 = vsel %vm400, %v380, 0
        %v423 = vsel %vm400, %v381, 0
        %v426 = vsel %vm400, %v382, 0
        %v429 = vsel %vm400, %v383, 0
        %v432 = vsel %vm400, %v384, 0
        %v435 = vsel %vm400, %v385, 0
        %v438 = vsel %vm400, %v386, 0
        %v441 = vsel %vm400, %v387, 0
        %443 = vmatpush.bf16.msra.mxu0 0
        %444 = vmatpush.bf16.msra.mxu0 0
        %445 = vmatpush.bf16.msra.mxu0 0
        %446 = vmatpush.bf16.msra.mxu0 0
        %447 = vmatpush.bf16.msra.mxu0 0
        %448 = vmatpush.bf16.msra.mxu0 0
        %449 = vmatpush.bf16.msra.mxu0 %v397
        %450 = vmatpush.bf16.msra.mxu0 %v396
        %451 = vmatmul.bf16.gmra.mxu0 %v402
        %v452 = vpop.f32.mrf.mxu0
        %v453 = vadd.f32 %v316, %v452
        %v454 = vpop.f32.mrf.mxu0
        %v455 = vadd.f32 %v316, %v454
        %456 = vmatmul.bf16.gmra.mxu0 %v405
        %v457 = vpop.f32.mrf.mxu0
        %v458 = vadd.f32 %v316, %v457
        %v459 = vpop.f32.mrf.mxu0
        %v460 = vadd.f32 %v316, %v459
        %461 = vmatmul.bf16.gmra.mxu0 %v408
        %v462 = vpop.f32.mrf.mxu0
        %v463 = vadd.f32 %v316, %v462
        %v464 = vpop.f32.mrf.mxu0
        %v465 = vadd.f32 %v316, %v464
        %466 = vmatmul.bf16.gmra.mxu0 %v411
        %v467 = vpop.f32.mrf.mxu0
        %v468 = vadd.f32 %v316, %v467
        %v469 = vpop.f32.mrf.mxu0
        %v470 = vadd.f32 %v316, %v469
        %471 = vmatmul.bf16.gmra.mxu0 %v414
        %v472 = vpop.f32.mrf.mxu0
        %v473 = vadd.f32 %v316, %v472
        %v474 = vpop.f32.mrf.mxu0
        %v475 = vadd.f32 %v316, %v474
        %476 = vmatmul.bf16.gmra.mxu0 %v417
        %v477 = vpop.f32.mrf.mxu0
        %v478 = vadd.f32 %v316, %v477
        %v479 = vpop.f32.mrf.mxu0
        %v480 = vadd.f32 %v316, %v479
        %481 = vmatmul.bf16.gmra.mxu0 %v420
        %v482 = vpop.f32.mrf.mxu0
        %v483 = vadd.f32 %v316, %v482
        %v484 = vpop.f32.mrf.mxu0
        %v485 = vadd.f32 %v316, %v484
        %486 = vmatmul.bf16.gmra.mxu0 %v423
        %v487 = vpop.f32.mrf.mxu0
        %v488 = vadd.f32 %v316, %v487
        %v489 = vpop.f32.mrf.mxu0
        %v490 = vadd.f32 %v316, %v489
        %491 = vmatmul.bf16.gmra.mxu0 %v426
        %v492 = vpop.f32.mrf.mxu0
        %v493 = vadd.f32 %v316, %v492
        %v494 = vpop.f32.mrf.mxu0
        %v495 = vadd.f32 %v316, %v494
        %496 = vmatmul.bf16.gmra.mxu0 %v429
        %v497 = vpop.f32.mrf.mxu0
        %v498 = vadd.f32 %v316, %v497
        %v499 = vpop.f32.mrf.mxu0
        %v500 = vadd.f32 %v316, %v499
        %501 = vmatmul.bf16.gmra.mxu0 %v432
        %v502 = vpop.f32.mrf.mxu0
        %v503 = vadd.f32 %v316, %v502
        %v504 = vpop.f32.mrf.mxu0
        %v505 = vadd.f32 %v316, %v504
        %506 = vmatmul.bf16.gmra.mxu0 %v435
        %v507 = vpop.f32.mrf.mxu0
        %v508 = vadd.f32 %v316, %v507
        %v509 = vpop.f32.mrf.mxu0
        %v510 = vadd.f32 %v316, %v509
        %511 = vmatmul.bf16.gmra.mxu0 %v438
        %v512 = vpop.f32.mrf.mxu0
        %v513 = vadd.f32 %v316, %v512
        %v514 = vpop.f32.mrf.mxu0
        %v515 = vadd.f32 %v316, %v514
        %516 = vmatmul.bf16.gmra.mxu0 %v441
        %v517 = vpop.f32.mrf.mxu0
        %v518 = vadd.f32 %v316, %v517
        %v519 = vpop.f32.mrf.mxu0
        %v520 = vadd.f32 %v316, %v519
        %521 = vdwg.mxu0
        %v522 = vtanh.pop %v453
        %v523 = vtanh.pop %v455
        %v524 = vtanh.pop %v458
        %v525 = vtanh.pop %v460
        %v526 = vtanh.pop %v463
        %v527 = vtanh.pop %v465
        %v528 = vtanh.pop %v468
        %v529 = vtanh.pop %v470
        %v530 = vtanh.pop %v473
        %v531 = vtanh.pop %v475
        %v532 = vtanh.pop %v478
        %v533 = vtanh.pop %v480
        %v534 = vtanh.pop %v483
        %v535 = vtanh.pop %v485
        %v536 = vtanh.pop %v488
        %v537 = vtanh.pop %v490
        %v538 = vtanh.pop %v493
        %v539 = vtanh.pop %v495
        %v540 = vtanh.pop %v498
        %v541 = vtanh.pop %v500
        %v542 = vtanh.pop %v503
        %v543 = vtanh.pop %v505
        %v544 = vtanh.pop %v508
        %v545 = vtanh.pop %v510
        %v546 = vtanh.pop %v513
        %v547 = vtanh.pop %v515
        %v548 = vtanh.pop %v518
        %v549 = vtanh.pop %v520
        %v550 = vld [vmem:[%s5] sm:$0x1]
        %v552 = vperm.slane %v550, 0
        %v554 = vmul.f32 %v522, %v552
        %v555 = vmul.f32 %v523, %v552
        %v556 = vmul.f32 %v524, %v552
        %v557 = vmul.f32 %v525, %v552
        %v558 = vmul.f32 %v526, %v552
        %v559 = vmul.f32 %v527, %v552
        %v560 = vmul.f32 %v528, %v552
        %v561 = vmul.f32 %v529, %v552
        %v562 = vmul.f32 %v530, %v552
        %v563 = vmul.f32 %v531, %v552
        %v564 = vmul.f32 %v532, %v552
        %v565 = vmul.f32 %v533, %v552
        %v566 = vmul.f32 %v534, %v552
        %v567 = vmul.f32 %v535, %v552
        %v568 = vmul.f32 %v536, %v552
        %v569 = vmul.f32 %v537, %v552
        %v570 = vmul.f32 %v538, %v552
        %v571 = vmul.f32 %v539, %v552
        %v572 = vmul.f32 %v540, %v552
        %v573 = vmul.f32 %v541, %v552
        %v574 = vmul.f32 %v542, %v552
        %v575 = vmul.f32 %v543, %v552
        %v576 = vmul.f32 %v544, %v552
        %v577 = vmul.f32 %v545, %v552
        %v578 = vmul.f32 %v546, %v552
        %v579 = vmul.f32 %v547, %v552
        %v580 = vmul.f32 %v548, %v552
        %v581 = vmul.f32 %v549, %v552
        %v582 = vsel %vm400, %v554, 0.0
        %583 = vadd.xlane.f32.xlu0 %v582
        %v584 = vpop.xlane.xlu0 %583
        %v585 = vsel %vm400, %v555, 0.0
        %586 = vadd.xlane.f32.xlu0 %v585
        %v587 = vpop.xlane.xlu0 %586
        %v588 = vsel %vm400, %v556, 0.0
        %589 = vadd.xlane.f32.xlu0 %v588
        %v590 = vpop.xlane.xlu0 %589
        %v591 = vsel %vm400, %v557, 0.0
        %592 = vadd.xlane.f32.xlu0 %v591
        %v593 = vpop.xlane.xlu0 %592
        %v594 = vsel %vm400, %v558, 0.0
        %595 = vadd.xlane.f32.xlu0 %v594
        %v596 = vpop.xlane.xlu0 %595
        %v597 = vsel %vm400, %v559, 0.0
        %598 = vadd.xlane.f32.xlu0 %v597
        %v599 = vpop.xlane.xlu0 %598
        %v600 = vsel %vm400, %v560, 0.0
        %601 = vadd.xlane.f32.xlu0 %v600
        %v602 = vpop.xlane.xlu0 %601
        %v603 = vsel %vm400, %v561, 0.0
        %604 = vadd.xlane.f32.xlu0 %v603
        %v605 = vpop.xlane.xlu0 %604
        %v606 = vsel %vm400, %v562, 0.0
        %607 = vadd.xlane.f32.xlu0 %v606
        %v608 = vpop.xlane.xlu0 %607
        %v609 = vsel %vm400, %v563, 0.0
        %610 = vadd.xlane.f32.xlu0 %v609
        %v611 = vpop.xlane.xlu0 %610
        %v612 = vsel %vm400, %v564, 0.0
        %613 = vadd.xlane.f32.xlu0 %v612
        %v614 = vpop.xlane.xlu0 %613
        %v615 = vsel %vm400, %v565, 0.0
        %616 = vadd.xlane.f32.xlu0 %v615
        %v617 = vpop.xlane.xlu0 %616
        %v618 = vsel %vm400, %v566, 0.0
        %619 = vadd.xlane.f32.xlu0 %v618
        %v620 = vpop.xlane.xlu0 %619
        %v621 = vsel %vm400, %v567, 0.0
        %622 = vadd.xlane.f32.xlu0 %v621
        %v623 = vpop.xlane.xlu0 %622
        %v624 = vsel %vm400, %v568, 0.0
        %625 = vadd.xlane.f32.xlu0 %v624
        %v626 = vpop.xlane.xlu0 %625
        %v627 = vsel %vm400, %v569, 0.0
        %628 = vadd.xlane.f32.xlu0 %v627
        %v629 = vpop.xlane.xlu0 %628
        %v630 = vsel %vm400, %v570, 0.0
        %631 = vadd.xlane.f32.xlu0 %v630
        %v632 = vpop.xlane.xlu0 %631
        %v633 = vsel %vm400, %v571, 0.0
        %634 = vadd.xlane.f32.xlu0 %v633
        %v635 = vpop.xlane.xlu0 %634
        %v636 = vsel %vm400, %v572, 0.0
        %637 = vadd.xlane.f32.xlu0 %v636
        %v638 = vpop.xlane.xlu0 %637
        %v639 = vsel %vm400, %v573, 0.0
        %640 = vadd.xlane.f32.xlu0 %v639
        %v641 = vpop.xlane.xlu0 %640
        %v642 = vsel %vm400, %v574, 0.0
        %643 = vadd.xlane.f32.xlu0 %v642
        %v644 = vpop.xlane.xlu0 %643
        %v645 = vsel %vm400, %v575, 0.0
        %646 = vadd.xlane.f32.xlu0 %v645
        %v647 = vpop.xlane.xlu0 %646
        %v648 = vsel %vm400, %v576, 0.0
        %649 = vadd.xlane.f32.xlu0 %v648
        %v650 = vpop.xlane.xlu0 %649
        %v651 = vsel %vm400, %v577, 0.0
        %652 = vadd.xlane.f32.xlu0 %v651
        %v653 = vpop.xlane.xlu0 %652
        %v654 = vsel %vm400, %v578, 0.0
        %655 = vadd.xlane.f32.xlu0 %v654
        %v656 = vpop.xlane.xlu0 %655
        %v657 = vsel %vm400, %v579, 0.0
        %658 = vadd.xlane.f32.xlu0 %v657
        %v659 = vpop.xlane.xlu0 %658
        %v660 = vsel %vm400, %v580, 0.0
        %661 = vadd.xlane.f32.xlu0 %v660
        %v662 = vpop.xlane.xlu0 %661
        %v663 = vsel %vm400, %v581, 0.0
        %664 = vadd.xlane.f32.xlu0 %v663
        %v665 = vpop.xlane.xlu0 %664
        %v666 = vlaneseq
        %v667 = vshrl.u32 %v666, 7
        %v668 = vadd.s32 %v667, 8
        %v669 = vadd.s32 %v667, 16
        %v670 = vadd.s32 %v667, 24
        %v671 = vadd.s32 %v667, 32
        %v672 = vadd.s32 %v667, 40
        %v673 = vadd.s32 %v667, 48
        %v674 = vadd.s32 %v667, 56
        %v675 = vadd.s32 %v667, 64
        %v676 = vadd.s32 %v667, 72
        %v677 = vadd.s32 %v667, 80
        %v678 = vadd.s32 %v667, 88
        %v679 = vadd.s32 %v667, 96
        %v680 = vadd.s32 %v667, 104
        %v681 = vadd.s32 %v667, 112
        %v682 = vadd.s32 %v667, 120
        %v683 = vadd.s32 %v667, 128
        %v684 = vadd.s32 %v667, 136
        %v685 = vadd.s32 %v667, 144
        %v686 = vadd.s32 %v667, 152
        %v687 = vadd.s32 %v667, 160
        %v688 = vadd.s32 %v667, 168
        %v689 = vadd.s32 %v667, 176
        %v690 = vadd.s32 %v667, 184
        %v691 = vadd.s32 %v667, 192
        %v692 = vadd.s32 %v667, 200
        %v693 = vadd.s32 %v667, 208
        %v694 = vadd.s32 %v667, 216
        %v695 = vld [vmem:[%s280] sm:$0x1]
        %v696 = vperm.slane %v695, 0
        %vm697 = vcmp.lt.s32.totalorder %v667, %v696
        %vm698 = vcmp.lt.s32.totalorder %v668, %v696
        %vm699 = vcmp.lt.s32.totalorder %v669, %v696
        %vm700 = vcmp.lt.s32.totalorder %v670, %v696
        %vm701 = vcmp.lt.s32.totalorder %v671, %v696
        %vm702 = vcmp.lt.s32.totalorder %v672, %v696
        %vm703 = vcmp.lt.s32.totalorder %v673, %v696
        %vm704 = vcmp.lt.s32.totalorder %v674, %v696
        %vm705 = vcmp.lt.s32.totalorder %v675, %v696
        %vm706 = vcmp.lt.s32.totalorder %v676, %v696
        %vm707 = vcmp.lt.s32.totalorder %v677, %v696
        %vm708 = vcmp.lt.s32.totalorder %v678, %v696
        %vm709 = vcmp.lt.s32.totalorder %v679, %v696
        %vm710 = vcmp.lt.s32.totalorder %v680, %v696
        %vm711 = vcmp.lt.s32.totalorder %v681, %v696
        %vm712 = vcmp.lt.s32.totalorder %v682, %v696
        %vm713 = vcmp.lt.s32.totalorder %v683, %v696
        %vm714 = vcmp.lt.s32.totalorder %v684, %v696
        %vm715 = vcmp.lt.s32.totalorder %v685, %v696
        %vm716 = vcmp.lt.s32.totalorder %v686, %v696
        %vm717 = vcmp.lt.s32.totalorder %v687, %v696
        %vm718 = vcmp.lt.s32.totalorder %v688, %v696
        %vm719 = vcmp.lt.s32.totalorder %v689, %v696
        %vm720 = vcmp.lt.s32.totalorder %v690, %v696
        %vm721 = vcmp.lt.s32.totalorder %v691, %v696
        %vm722 = vcmp.lt.s32.totalorder %v692, %v696
        %vm723 = vcmp.lt.s32.totalorder %v693, %v696
        %vm724 = vcmp.lt.s32.totalorder %v694, %v696
        %v725 = vsel %vm697, %v584, -1e+30
        %v726 = vsel %vm698, %v587, -1e+30
        %v727 = vsel %vm699, %v590, -1e+30
        %v728 = vsel %vm700, %v593, -1e+30
        %v729 = vsel %vm701, %v596, -1e+30
        %v730 = vsel %vm702, %v599, -1e+30
        %v731 = vsel %vm703, %v602, -1e+30
        %v732 = vsel %vm704, %v605, -1e+30
        %v733 = vsel %vm705, %v608, -1e+30
        %v734 = vsel %vm706, %v611, -1e+30
        %v735 = vsel %vm707, %v614, -1e+30
        %v736 = vsel %vm708, %v617, -1e+30
        %v737 = vsel %vm709, %v620, -1e+30
        %v738 = vsel %vm710, %v623, -1e+30
        %v739 = vsel %vm711, %v626, -1e+30
        %v740 = vsel %vm712, %v629, -1e+30
        %v741 = vsel %vm713, %v632, -1e+30
        %v742 = vsel %vm714, %v635, -1e+30
        %v743 = vsel %vm715, %v638, -1e+30
        %v744 = vsel %vm716, %v641, -1e+30
        %v745 = vsel %vm717, %v644, -1e+30
        %v746 = vsel %vm718, %v647, -1e+30
        %v747 = vsel %vm719, %v650, -1e+30
        %v748 = vsel %vm720, %v653, -1e+30
        %v749 = vsel %vm721, %v656, -1e+30
        %v750 = vsel %vm722, %v659, -1e+30
        %v751 = vsel %vm723, %v662, -1e+30
        %v752 = vsel %vm724, %v665, -1e+30
        %vm753 = vcmask 7168
        %v754 = vsel %vm753, %v725, -inf
        %v755 = vsel %vm753, %v726, -inf
        %v756 = vsel %vm753, %v727, -inf
        %v757 = vsel %vm753, %v728, -inf
        %v758 = vsel %vm753, %v729, -inf
        %v759 = vmax.f32 %v754, %v758
        %v760 = vsel %vm753, %v730, -inf
        %v761 = vmax.f32 %v755, %v760
        %v762 = vsel %vm753, %v731, -inf
        %v763 = vmax.f32 %v756, %v762
        %v764 = vsel %vm753, %v732, -inf
        %v765 = vmax.f32 %v757, %v764
        %v766 = vsel %vm753, %v733, -inf
        %v767 = vmax.f32 %v759, %v766
        %v768 = vsel %vm753, %v734, -inf
        %v769 = vmax.f32 %v761, %v768
        %v770 = vsel %vm753, %v735, -inf
        %v771 = vmax.f32 %v763, %v770
        %v772 = vsel %vm753, %v736, -inf
        %v773 = vmax.f32 %v765, %v772
        %v774 = vsel %vm753, %v737, -inf
        %v775 = vmax.f32 %v767, %v774
        %v776 = vsel %vm753, %v738, -inf
        %v777 = vmax.f32 %v769, %v776
        %v778 = vsel %vm753, %v739, -inf
        %v779 = vmax.f32 %v771, %v778
        %v780 = vsel %vm753, %v740, -inf
        %v781 = vmax.f32 %v773, %v780
        %v782 = vsel %vm753, %v741, -inf
        %v783 = vmax.f32 %v775, %v782
        %v784 = vsel %vm753, %v742, -inf
        %v785 = vmax.f32 %v777, %v784
        %v786 = vsel %vm753, %v743, -inf
        %v787 = vmax.f32 %v779, %v786
        %v788 = vsel %vm753, %v744, -inf
        %v789 = vmax.f32 %v781, %v788
        %v790 = vsel %vm753, %v745, -inf
        %v791 = vmax.f32 %v783, %v790
        %v792 = vsel %vm753, %v746, -inf
        %v793 = vmax.f32 %v785, %v792
        %v794 = vsel %vm753, %v747, -inf
        %v795 = vmax.f32 %v787, %v794
        %v796 = vsel %vm753, %v748, -inf
        %v797 = vmax.f32 %v789, %v796
        %v798 = vsel %vm753, %v749, -inf
        %v799 = vmax.f32 %v791, %v798
        %v800 = vsel %vm753, %v750, -inf
        %v801 = vmax.f32 %v793, %v800
        %v802 = vsel %vm753, %v751, -inf
        %v803 = vmax.f32 %v795, %v802
        %v804 = vsel %vm753, %v752, -inf
        %v805 = vmax.f32 %v797, %v804
        %v806 = vmax.f32 %v799, %v801
        %v807 = vmax.f32 %v803, %v805
        %v808 = vmax.f32 %v806, %v807
        %v809 = vrot.slane %v808, 4
        %v810 = vmax.f32 %v808, %v809
        %v811 = vrot.slane %v810, 2
        %v812 = vmax.f32 %v810, %v811
        %v813 = vrot.slane %v812, 1
        %v814 = vmax.f32 %v812, %v813
        %v815 = vsub.f32 %v725, %v814
        %v816 = vsub.f32 %v726, %v814
        %v817 = vsub.f32 %v727, %v814
        %v818 = vsub.f32 %v728, %v814
        %v819 = vsub.f32 %v729, %v814
        %v820 = vsub.f32 %v730, %v814
        %v821 = vsub.f32 %v731, %v814
        %v822 = vsub.f32 %v732, %v814
        %v823 = vsub.f32 %v733, %v814
        %v824 = vsub.f32 %v734, %v814
        %v825 = vsub.f32 %v735, %v814
        %v826 = vsub.f32 %v736, %v814
        %v827 = vsub.f32 %v737, %v814
        %v828 = vsub.f32 %v738, %v814
        %v829 = vsub.f32 %v739, %v814
        %v830 = vsub.f32 %v740, %v814
        %v831 = vsub.f32 %v741, %v814
        %v832 = vsub.f32 %v742, %v814
        %v833 = vsub.f32 %v743, %v814
        %v834 = vsub.f32 %v744, %v814
        %v835 = vsub.f32 %v745, %v814
        %v836 = vsub.f32 %v746, %v814
        %v837 = vsub.f32 %v747, %v814
        %v838 = vsub.f32 %v748, %v814
        %v839 = vsub.f32 %v749, %v814
        %v840 = vsub.f32 %v750, %v814
        %v841 = vsub.f32 %v751, %v814
        %v842 = vsub.f32 %v752, %v814
        %v843 = vmul.f32 %v815, 1.442695
        %v844 = vpow.pop %v843
        %v845 = vmul.f32 %v816, 1.442695
        %v846 = vpow.pop %v845
        %v847 = vmul.f32 %v817, 1.442695
        %v848 = vpow.pop %v847
        %v849 = vmul.f32 %v818, 1.442695
        %v850 = vpow.pop %v849
        %v851 = vmul.f32 %v819, 1.442695
        %v852 = vpow.pop %v851
        %v853 = vmul.f32 %v820, 1.442695
        %v854 = vpow.pop %v853
        %v855 = vmul.f32 %v821, 1.442695
        %v856 = vpow.pop %v855
        %v857 = vmul.f32 %v822, 1.442695
        %v858 = vpow.pop %v857
        %v859 = vmul.f32 %v823, 1.442695
        %v860 = vpow.pop %v859
        %v861 = vmul.f32 %v824, 1.442695
        %v862 = vpow.pop %v861
        %v863 = vmul.f32 %v825, 1.442695
        %v864 = vpow.pop %v863
        %v865 = vmul.f32 %v826, 1.442695
        %v866 = vpow.pop %v865
        %v867 = vmul.f32 %v827, 1.442695
        %v868 = vpow.pop %v867
        %v869 = vmul.f32 %v828, 1.442695
        %v870 = vpow.pop %v869
        %v871 = vmul.f32 %v829, 1.442695
        %v872 = vpow.pop %v871
        %v873 = vmul.f32 %v830, 1.442695
        %v874 = vpow.pop %v873
        %v875 = vmul.f32 %v831, 1.442695
        %v876 = vpow.pop %v875
        %v877 = vmul.f32 %v832, 1.442695
        %v878 = vpow.pop %v877
        %v879 = vmul.f32 %v833, 1.442695
        %v880 = vpow.pop %v879
        %v881 = vmul.f32 %v834, 1.442695
        %v882 = vpow.pop %v881
        %v883 = vmul.f32 %v835, 1.442695
        %v884 = vpow.pop %v883
        %v885 = vmul.f32 %v836, 1.442695
        %v886 = vpow.pop %v885
        %v887 = vmul.f32 %v837, 1.442695
        %v888 = vpow.pop %v887
        %v889 = vmul.f32 %v838, 1.442695
        %v890 = vpow.pop %v889
        %v891 = vmul.f32 %v839, 1.442695
        %v892 = vpow.pop %v891
        %v893 = vmul.f32 %v840, 1.442695
        %v894 = vpow.pop %v893
        %v895 = vmul.f32 %v841, 1.442695
        %v896 = vpow.pop %v895
        %v897 = vmul.f32 %v842, 1.442695
        %v898 = vpow.pop %v897
        %v899 = vsel %vm753, %v844, 0.0
        %v900 = vsel %vm753, %v846, 0.0
        %v901 = vadd.f32 %v899, %v900
        %v902 = vsel %vm753, %v848, 0.0
        %v903 = vadd.f32 %v901, %v902
        %v904 = vsel %vm753, %v850, 0.0
        %v905 = vadd.f32 %v903, %v904
        %v906 = vsel %vm753, %v852, 0.0
        %v907 = vadd.f32 %v905, %v906
        %v908 = vsel %vm753, %v854, 0.0
        %v909 = vadd.f32 %v907, %v908
        %v910 = vsel %vm753, %v856, 0.0
        %v911 = vadd.f32 %v909, %v910
        %v912 = vsel %vm753, %v858, 0.0
        %v913 = vadd.f32 %v911, %v912
        %v914 = vsel %vm753, %v860, 0.0
        %v915 = vadd.f32 %v913, %v914
        %v916 = vsel %vm753, %v862, 0.0
        %v917 = vadd.f32 %v915, %v916
        %v918 = vsel %vm753, %v864, 0.0
        %v919 = vadd.f32 %v917, %v918
        %v920 = vsel %vm753, %v866, 0.0
        %v921 = vadd.f32 %v919, %v920
        %v922 = vsel %vm753, %v868, 0.0
        %v923 = vadd.f32 %v921, %v922
        %v924 = vsel %vm753, %v870, 0.0
        %v925 = vadd.f32 %v923, %v924
        %v926 = vsel %vm753, %v872, 0.0
        %v927 = vadd.f32 %v925, %v926
        %v928 = vsel %vm753, %v874, 0.0
        %v929 = vadd.f32 %v927, %v928
        %v930 = vsel %vm753, %v876, 0.0
        %v931 = vadd.f32 %v929, %v930
        %v932 = vsel %vm753, %v878, 0.0
        %v933 = vadd.f32 %v931, %v932
        %v934 = vsel %vm753, %v880, 0.0
        %v935 = vadd.f32 %v933, %v934
        %v936 = vsel %vm753, %v882, 0.0
        %v937 = vadd.f32 %v935, %v936
        %v938 = vsel %vm753, %v884, 0.0
        %v939 = vadd.f32 %v937, %v938
        %v940 = vsel %vm753, %v886, 0.0
        %v941 = vadd.f32 %v939, %v940
        %v942 = vsel %vm753, %v888, 0.0
        %v943 = vadd.f32 %v941, %v942
        %v944 = vsel %vm753, %v890, 0.0
        %v945 = vadd.f32 %v943, %v944
        %v946 = vsel %vm753, %v892, 0.0
        %v947 = vadd.f32 %v945, %v946
        %v948 = vsel %vm753, %v894, 0.0
        %v949 = vadd.f32 %v947, %v948
        %v950 = vsel %vm753, %v896, 0.0
        %v951 = vadd.f32 %v949, %v950
        %v952 = vsel %vm753, %v898, 0.0
        %v953 = vadd.f32 %v951, %v952
        %v954 = vrot.slane %v953, 4
        %v955 = vadd.f32 %v953, %v954
        %v956 = vrot.slane %v955, 2
        %v957 = vadd.f32 %v955, %v956
        %v958 = vrot.slane %v957, 1
        %v959 = vadd.f32 %v957, %v958
        %v960 = vrcp.pop %v959
        %v961 = vmul.f32 %v959, %v960
        %v962 = vsub.f32 1.0, %v961
        %v963 = vmul.f32 %v960, %v962
        %v964 = vadd.f32 %v960, %v963
        %vm965 = vweird.f32 %v959
        %vm966 = vweird.f32 %v960
        %vm967 = vmor %vm965, %vm966
        %v968 = vsel %vm967, %v960, %v964
        %v969 = vand.u32 2147483647, %v959
        %vm970 = vcmp.eq.f32.partialorder %v969, 8.507059e+37
        %v971 = vand.u32 %v959, 2147483648
        %v972 = vor.u32 1.1754944e-38, %v971
        %v973 = vsel %vm970, %v972, %v968
        %v974 = vmul.f32 1.0, %v973
        %v975 = vmul.f32 %v844, %v974
        %v976 = vmul.f32 %v846, %v974
        %v977 = vmul.f32 %v848, %v974
        %v978 = vmul.f32 %v850, %v974
        %v979 = vmul.f32 %v852, %v974
        %v980 = vmul.f32 %v854, %v974
        %v981 = vmul.f32 %v856, %v974
        %v982 = vmul.f32 %v858, %v974
        %v983 = vmul.f32 %v860, %v974
        %v984 = vmul.f32 %v862, %v974
        %v985 = vmul.f32 %v864, %v974
        %v986 = vmul.f32 %v866, %v974
        %v987 = vmul.f32 %v868, %v974
        %v988 = vmul.f32 %v870, %v974
        %v989 = vmul.f32 %v872, %v974
        %v990 = vmul.f32 %v874, %v974
        %v991 = vmul.f32 %v876, %v974
        %v992 = vmul.f32 %v878, %v974
        %v993 = vmul.f32 %v880, %v974
        %v994 = vmul.f32 %v882, %v974
        %v995 = vmul.f32 %v884, %v974
        %v996 = vmul.f32 %v886, %v974
        %v997 = vmul.f32 %v888, %v974
        %v998 = vmul.f32 %v890, %v974
        %v999 = vmul.f32 %v892, %v974
        %v1000 = vmul.f32 %v894, %v974
        %v1001 = vmul.f32 %v896, %v974
        %v1002 = vmul.f32 %v898, %v974
        %v1003 = vunpack.c.l.bf16 %v282
        %v1004 = vunpack.c.l.bf16 %v283
        %v1005 = vunpack.c.l.bf16 %v284
        %v1006 = vunpack.c.l.bf16 %v285
        %v1007 = vunpack.c.l.bf16 %v286
        %v1008 = vunpack.c.l.bf16 %v287
        %v1009 = vunpack.c.l.bf16 %v288
        %v1010 = vunpack.c.l.bf16 %v289
        %v1011 = vunpack.c.l.bf16 %v290
        %v1012 = vunpack.c.l.bf16 %v291
        %v1013 = vunpack.c.l.bf16 %v292
        %v1014 = vunpack.c.l.bf16 %v293
        %v1015 = vunpack.c.l.bf16 %v294
        %v1016 = vunpack.c.l.bf16 %v295
        %v1017 = vunpack.c.l.bf16 %v296
        %v1018 = vunpack.c.l.bf16 %v297
        %v1019 = vunpack.c.l.bf16 %v298
        %v1020 = vunpack.c.l.bf16 %v299
        %v1021 = vunpack.c.l.bf16 %v300
        %v1022 = vunpack.c.l.bf16 %v301
        %v1023 = vunpack.c.l.bf16 %v302
        %v1024 = vunpack.c.l.bf16 %v303
        %v1025 = vunpack.c.l.bf16 %v304
        %v1026 = vunpack.c.l.bf16 %v305
        %v1027 = vunpack.c.l.bf16 %v306
        %v1028 = vunpack.c.l.bf16 %v307
        %v1029 = vunpack.c.l.bf16 %v308
        %v1030 = vunpack.c.l.bf16 %v309
        %1032 = vset.pattern.permute.xlu0 0
        %1033 = vperm.xlu0 %1032, %v975
        %v1034 = vpop.permute.xlu0 %1033
        %1037 = vset.pattern.permute.xlu0 0
        %1038 = vperm.xlu0 %1037, %v976
        %v1039 = vpop.permute.xlu0 %1038
        %1042 = vset.pattern.permute.xlu0 0
        %1043 = vperm.xlu0 %1042, %v977
        %v1044 = vpop.permute.xlu0 %1043
        %1047 = vset.pattern.permute.xlu0 0
        %1048 = vperm.xlu0 %1047, %v978
        %v1049 = vpop.permute.xlu0 %1048
        %1052 = vset.pattern.permute.xlu0 0
        %1053 = vperm.xlu0 %1052, %v979
        %v1054 = vpop.permute.xlu0 %1053
        %1057 = vset.pattern.permute.xlu0 0
        %1058 = vperm.xlu0 %1057, %v980
        %v1059 = vpop.permute.xlu0 %1058
        %1062 = vset.pattern.permute.xlu0 0
        %1063 = vperm.xlu0 %1062, %v981
        %v1064 = vpop.permute.xlu0 %1063
        %1067 = vset.pattern.permute.xlu0 0
        %1068 = vperm.xlu0 %1067, %v982
        %v1069 = vpop.permute.xlu0 %1068
        %1072 = vset.pattern.permute.xlu0 0
        %1073 = vperm.xlu0 %1072, %v983
        %v1074 = vpop.permute.xlu0 %1073
        %1077 = vset.pattern.permute.xlu0 0
        %1078 = vperm.xlu0 %1077, %v984
        %v1079 = vpop.permute.xlu0 %1078
        %1082 = vset.pattern.permute.xlu0 0
        %1083 = vperm.xlu0 %1082, %v985
        %v1084 = vpop.permute.xlu0 %1083
        %1087 = vset.pattern.permute.xlu0 0
        %1088 = vperm.xlu0 %1087, %v986
        %v1089 = vpop.permute.xlu0 %1088
        %1092 = vset.pattern.permute.xlu0 0
        %1093 = vperm.xlu0 %1092, %v987
        %v1094 = vpop.permute.xlu0 %1093
        %1097 = vset.pattern.permute.xlu0 0
        %1098 = vperm.xlu0 %1097, %v988
        %v1099 = vpop.permute.xlu0 %1098
        %1102 = vset.pattern.permute.xlu0 0
        %1103 = vperm.xlu0 %1102, %v989
        %v1104 = vpop.permute.xlu0 %1103
        %1107 = vset.pattern.permute.xlu0 0
        %1108 = vperm.xlu0 %1107, %v990
        %v1109 = vpop.permute.xlu0 %1108
        %1112 = vset.pattern.permute.xlu0 0
        %1113 = vperm.xlu0 %1112, %v991
        %v1114 = vpop.permute.xlu0 %1113
        %1117 = vset.pattern.permute.xlu0 0
        %1118 = vperm.xlu0 %1117, %v992
        %v1119 = vpop.permute.xlu0 %1118
        %1122 = vset.pattern.permute.xlu0 0
        %1123 = vperm.xlu0 %1122, %v993
        %v1124 = vpop.permute.xlu0 %1123
        %1127 = vset.pattern.permute.xlu0 0
        %1128 = vperm.xlu0 %1127, %v994
        %v1129 = vpop.permute.xlu0 %1128
        %1132 = vset.pattern.permute.xlu0 0
        %1133 = vperm.xlu0 %1132, %v995
        %v1134 = vpop.permute.xlu0 %1133
        %1137 = vset.pattern.permute.xlu0 0
        %1138 = vperm.xlu0 %1137, %v996
        %v1139 = vpop.permute.xlu0 %1138
        %1142 = vset.pattern.permute.xlu0 0
        %1143 = vperm.xlu0 %1142, %v997
        %v1144 = vpop.permute.xlu0 %1143
        %1147 = vset.pattern.permute.xlu0 0
        %1148 = vperm.xlu0 %1147, %v998
        %v1149 = vpop.permute.xlu0 %1148
        %1152 = vset.pattern.permute.xlu0 0
        %1153 = vperm.xlu0 %1152, %v999
        %v1154 = vpop.permute.xlu0 %1153
        %1157 = vset.pattern.permute.xlu0 0
        %1158 = vperm.xlu0 %1157, %v1000
        %v1159 = vpop.permute.xlu0 %1158
        %1162 = vset.pattern.permute.xlu0 0
        %1163 = vperm.xlu0 %1162, %v1001
        %v1164 = vpop.permute.xlu0 %1163
        %1167 = vset.pattern.permute.xlu0 0
        %1168 = vperm.xlu0 %1167, %v1002
        %v1169 = vpop.permute.xlu0 %1168
        %v1171 = vmul.f32 %v1034, %v1003
        %v1172 = vmul.f32 %v1039, %v1004
        %v1173 = vmul.f32 %v1044, %v1005
        %v1174 = vmul.f32 %v1049, %v1006
        %v1175 = vmul.f32 %v1054, %v1007
        %v1176 = vmul.f32 %v1059, %v1008
        %v1177 = vmul.f32 %v1064, %v1009
        %v1178 = vmul.f32 %v1069, %v1010
        %v1179 = vmul.f32 %v1074, %v1011
        %v1180 = vmul.f32 %v1079, %v1012
        %v1181 = vmul.f32 %v1084, %v1013
        %v1182 = vmul.f32 %v1089, %v1014
        %v1183 = vmul.f32 %v1094, %v1015
        %v1184 = vmul.f32 %v1099, %v1016
        %v1185 = vmul.f32 %v1104, %v1017
        %v1186 = vmul.f32 %v1109, %v1018
        %v1187 = vmul.f32 %v1114, %v1019
        %v1188 = vmul.f32 %v1119, %v1020
        %v1189 = vmul.f32 %v1124, %v1021
        %v1190 = vmul.f32 %v1129, %v1022
        %v1191 = vmul.f32 %v1134, %v1023
        %v1192 = vmul.f32 %v1139, %v1024
        %v1193 = vmul.f32 %v1144, %v1025
        %v1194 = vmul.f32 %v1149, %v1026
        %v1195 = vmul.f32 %v1154, %v1027
        %v1196 = vmul.f32 %v1159, %v1028
        %v1197 = vmul.f32 %v1164, %v1029
        %v1198 = vmul.f32 %v1169, %v1030
        %v1199 = vpack.c.bf16 %v1171, %v1171
        %v1200 = vpack.c.bf16 %v1172, %v1172
        %v1201 = vpack.c.bf16 %v1173, %v1173
        %v1202 = vpack.c.bf16 %v1174, %v1174
        %v1203 = vpack.c.bf16 %v1175, %v1175
        %v1204 = vpack.c.bf16 %v1176, %v1176
        %v1205 = vpack.c.bf16 %v1177, %v1177
        %v1206 = vpack.c.bf16 %v1178, %v1178
        %v1207 = vpack.c.bf16 %v1179, %v1179
        %v1208 = vpack.c.bf16 %v1180, %v1180
        %v1209 = vpack.c.bf16 %v1181, %v1181
        %v1210 = vpack.c.bf16 %v1182, %v1182
        %v1211 = vpack.c.bf16 %v1183, %v1183
        %v1212 = vpack.c.bf16 %v1184, %v1184
        %v1213 = vpack.c.bf16 %v1185, %v1185
        %v1214 = vpack.c.bf16 %v1186, %v1186
        %v1215 = vpack.c.bf16 %v1187, %v1187
        %v1216 = vpack.c.bf16 %v1188, %v1188
        %v1217 = vpack.c.bf16 %v1189, %v1189
        %v1218 = vpack.c.bf16 %v1190, %v1190
        %v1219 = vpack.c.bf16 %v1191, %v1191
        %v1220 = vpack.c.bf16 %v1192, %v1192
        %v1221 = vpack.c.bf16 %v1193, %v1193
        %v1222 = vpack.c.bf16 %v1194, %v1194
        %v1223 = vpack.c.bf16 %v1195, %v1195
        %v1224 = vpack.c.bf16 %v1196, %v1196
        %v1225 = vpack.c.bf16 %v1197, %v1197
        %v1226 = vpack.c.bf16 %v1198, %v1198
        %v1227 = vld [vmem:[%s277] sm:$0x3]
        %v1228 = vperm.slane %v1227, 0
        %v1229 = vperm.slane %v1227, 1
        %vm1230 = vcmp.eq.s32.totalorder %v1228, %v667
        %vm1231 = vcmp.eq.s32.totalorder %v1229, %v667
        %vm1232 = vcmp.eq.s32.totalorder %v1228, %v668
        %vm1233 = vcmp.eq.s32.totalorder %v1229, %v668
        %vm1234 = vcmp.eq.s32.totalorder %v1228, %v669
        %vm1235 = vcmp.eq.s32.totalorder %v1229, %v669
        %vm1236 = vcmp.eq.s32.totalorder %v1228, %v670
        %vm1237 = vcmp.eq.s32.totalorder %v1229, %v670
        %v1238 = vsel %vm1230, 1, 0
        %v1239 = vsel %vm1231, 1, 0
        %v1240 = vsel %vm1232, 1, 0
        %v1241 = vsel %vm1233, 1, 0
        %v1242 = vsel %vm1234, 1, 0
        %v1243 = vsel %vm1235, 1, 0
        %v1244 = vsel %vm1236, 1, 0
        %v1245 = vsel %vm1237, 1, 0
        %v1246 = vcvt.s32.f32 %v1238
        %v1247 = vcvt.s32.f32 %v1239
        %v1248 = vcvt.s32.f32 %v1240
        %v1249 = vcvt.s32.f32 %v1241
        %v1250 = vcvt.s32.f32 %v1242
        %v1251 = vcvt.s32.f32 %v1243
        %v1252 = vcvt.s32.f32 %v1244
        %v1253 = vcvt.s32.f32 %v1245
        %v1254 = vpack.c.bf16 %v1247, %v1246
        %v1255 = vpack.c.bf16 %v1249, %v1248
        %v1256 = vpack.c.bf16 %v1251, %v1250
        %v1257 = vpack.c.bf16 %v1253, %v1252
        %v1262 = vunpack.c.l.b16 %v1254
        %v1263 = vunpack.c.h.b16 %v1254
        %v1264 = vunpack.c.l.b16 %v1255
        %v1265 = vunpack.c.h.b16 %v1255
        %v1266 = vunpack.c.l.b16 %v1256
        %v1267 = vunpack.c.h.b16 %v1256
        %v1268 = vunpack.c.l.b16 %v1257
        %v1269 = vunpack.c.h.b16 %v1257
        %v1270 = vpack.c.b16 %v1264, %v1262
        %v1271 = vpack.c.b16 %v1265, %v1263
        %v1272 = vpack.c.b16 %v1268, %v1266
        %v1273 = vpack.c.b16 %v1269, %v1267
        %v1304 = vunpack.c.l.b16 %v1199
        %v1305 = vunpack.c.l.b16 %v1200
        %v1306 = vunpack.c.l.b16 %v1201
        %v1307 = vunpack.c.l.b16 %v1202
        %v1308 = vunpack.c.l.b16 %v1203
        %v1309 = vunpack.c.l.b16 %v1204
        %v1310 = vunpack.c.l.b16 %v1205
        %v1311 = vunpack.c.l.b16 %v1206
        %v1312 = vunpack.c.l.b16 %v1207
        %v1313 = vunpack.c.l.b16 %v1208
        %v1314 = vunpack.c.l.b16 %v1209
        %v1315 = vunpack.c.l.b16 %v1210
        %v1316 = vunpack.c.l.b16 %v1211
        %v1317 = vunpack.c.l.b16 %v1212
        %v1318 = vunpack.c.l.b16 %v1213
        %v1319 = vunpack.c.l.b16 %v1214
        %v1320 = vunpack.c.l.b16 %v1215
        %v1321 = vunpack.c.l.b16 %v1216
        %v1322 = vunpack.c.l.b16 %v1217
        %v1323 = vunpack.c.l.b16 %v1218
        %v1324 = vunpack.c.l.b16 %v1219
        %v1325 = vunpack.c.l.b16 %v1220
        %v1326 = vunpack.c.l.b16 %v1221
        %v1327 = vunpack.c.l.b16 %v1222
        %v1328 = vunpack.c.l.b16 %v1223
        %v1329 = vunpack.c.l.b16 %v1224
        %v1330 = vunpack.c.l.b16 %v1225
        %v1331 = vunpack.c.l.b16 %v1226
        %v1332 = vpack.c.b16 %v1305, %v1304
        %v1333 = vpack.c.b16 %v1307, %v1306
        %v1334 = vpack.c.b16 %v1309, %v1308
        %v1335 = vpack.c.b16 %v1311, %v1310
        %v1336 = vpack.c.b16 %v1313, %v1312
        %v1337 = vpack.c.b16 %v1315, %v1314
        %v1338 = vpack.c.b16 %v1317, %v1316
        %v1339 = vpack.c.b16 %v1319, %v1318
        %v1340 = vpack.c.b16 %v1321, %v1320
        %v1341 = vpack.c.b16 %v1323, %v1322
        %v1342 = vpack.c.b16 %v1325, %v1324
        %v1343 = vpack.c.b16 %v1327, %v1326
        %v1344 = vpack.c.b16 %v1329, %v1328
        %v1345 = vpack.c.b16 %v1331, %v1330
        %vm1360 = vcmask 785408
        %v1362 = vsel %vm1360, %v1271, 0
        %v1365 = vsel %vm1360, %v1273, 0
        %1367 = vmatpush.bf16.msra.mxu0 %v1339
        %1368 = vmatpush.bf16.msra.mxu0 %v1338
        %1369 = vmatpush.bf16.msra.mxu0 %v1337
        %1370 = vmatpush.bf16.msra.mxu0 %v1336
        %1371 = vmatpush.bf16.msra.mxu0 %v1335
        %1372 = vmatpush.bf16.msra.mxu0 %v1334
        %1373 = vmatpush.bf16.msra.mxu0 %v1333
        %1374 = vmatpush.bf16.msra.mxu0 %v1332
        %1375 = vmatmul.bf16.gmra.mxu0 %v1270
        %v1376 = vpop.f32.mrf.mxu0
        %v1377 = vadd.f32 0.0, %v1376
        %v1378 = vpop.f32.mrf.mxu0
        %v1379 = vadd.f32 0.0, %v1378
        %1380 = vmatmul.bf16.gmra.mxu0 %v1272
        %v1381 = vpop.f32.mrf.mxu0
        %v1382 = vadd.f32 0.0, %v1381
        %v1383 = vpop.f32.mrf.mxu0
        %v1384 = vadd.f32 0.0, %v1383
        %1385 = vdwg.mxu0
        %1386 = vmatpush.bf16.msra.mxu0 0
        %1387 = vmatpush.bf16.msra.mxu0 0
        %1388 = vmatpush.bf16.msra.mxu0 %v1345
        %1389 = vmatpush.bf16.msra.mxu0 %v1344
        %1390 = vmatpush.bf16.msra.mxu0 %v1343
        %1391 = vmatpush.bf16.msra.mxu0 %v1342
        %1392 = vmatpush.bf16.msra.mxu0 %v1341
        %1393 = vmatpush.bf16.msra.mxu0 %v1340
        %1394 = vmatmul.bf16.gmra.mxu0 %v1362
        %v1395 = vpop.f32.mrf.mxu0
        %v1396 = vadd.f32 %v1377, %v1395
        %v1397 = vpop.f32.mrf.mxu0
        %v1398 = vadd.f32 %v1379, %v1397
        %1399 = vmatmul.bf16.gmra.mxu0 %v1365
        %v1400 = vpop.f32.mrf.mxu0
        %v1401 = vadd.f32 %v1382, %v1400
        %v1402 = vpop.f32.mrf.mxu0
        %v1403 = vadd.f32 %v1384, %v1402
        %1404 = vdwg.mxu0
        %1405 = vst.msk [vmem:[%s268] sm:$0xff] %vm400, %v1396
        %1406 = vst.msk [vmem:[%s268 + $0x8] sm:$0xff] %vm400, %v1398
        %1407 = vst.msk [vmem:[%s268 + $0x10] sm:$0xff] %vm400, %v1401
        %1408 = vst.msk [vmem:[%s268 + $0x18] sm:$0xff] %vm400, %v1403
        %s1409 = sand.u32 %s169, 1
        %s1410 = scalar_lea.sflag [#allocation3], %s1409
        %s1411 = sand.u32 %s169, 1
        %s1412 = smul.addr %s1411, 32
        %s1413 = scalar_lea.vmem [#allocation2], %s1412
        // Predicated region
        $region45: #{tpu_custom_call.1} parent=43 // pred_check
          %p1414 = pneg %p179
        $region46: #{tpu_custom_call.1} parent=43 // pred_check_branch
          %1416 = sbr.rel (%p1414) target = $region48
        $region47: #{tpu_custom_call.1} parent=43 // pred_region
          %1418 = vsyncadd %s1410, 0
          %s1419 = smul.addr %s20, 4
          %s1420 = smul.addr %s1419, 8
          %s1421 = scalar_lea.hbm %s6, %s1420
          %s1422 = sshll.u32 %s1413, 4
          %s1423 = int_to_ptr.vmem [resolvable:$true] %s1422
          %s1424 = sshll.u32 %s1421, 4
          %s1425 = int_to_ptr.hbm [resolvable:$true] %s1424
          %1430 = dma.vmem_to_hbm [thread:$0]  %s1423, 512, %s1425, %s1410, 128, 128, 8
        $region48: #{tpu_custom_call.1} parent=43 // pred_fallthru
          _
      $region44: #{tpu_custom_call.1} parent=5 // pred_fallthru
        _
      %p1431 = scmp.le.s32.totalorder 2, %s15
      // Predicated region
      $region49: #{tpu_custom_call.1} parent=5 // pred_check
        %p1432 = pneg %p1431
      $region50: #{tpu_custom_call.1} parent=5 // pred_check_branch
        %1434 = sbr.rel (%p1432) target = $region52
      $region51: #{tpu_custom_call.1} parent=5 // pred_region
        %s1435 = ssub.s32 %s15, 2
        // Predicated region
        $region53: #{tpu_custom_call.1} parent=51 // pred_check
          %p1436 = pneg %p185
        $region54: #{tpu_custom_call.1} parent=51 // pred_check_branch
          %1438 = sbr.rel (%p1436) target = $region56
        $region55: #{tpu_custom_call.1} parent=51 // pred_region
          %s1439 = sand.u32 %s170, 1
          %s1440 = scalar_lea.sflag [#allocation3], %s1439
          %s1441 = sand.u32 %s170, 1
          %s1442 = smul.addr %s1441, 32
          %s1443 = scalar_lea.vmem [#allocation2], %s1442
          %1445 = dma.done %s1440, 512
        $region56: #{tpu_custom_call.1} parent=51 // pred_fallthru
          _
      $region52: #{tpu_custom_call.1} parent=5 // pred_fallthru
        _
    $region6: #{tpu_custom_call.1} parent=1 // loop_footer
      %s19 = sadd.s32 1, %s15
    $region7: #{tpu_custom_call.1} parent=1 // loop_footer_branch
      %14 = sbr.rel target = $region3
    $region8: #{tpu_custom_call.1} parent=1 // loop_exit
      _
    %1446 = vsyncpa [#allocation3], 1
    %s1447 = scalar_lea.sflag [#allocation3], 1
    %1448 = vsyncpa %s1447, 1

</llo_original>
